<compile_context>
chip_gen: v7x
topology: tpu7x:2x2x1
jax: 0.10.0
libtpu: 0.0.40
codegen_flags: <defaults>
</compile_context>

<pallas_src>
import functools

import jax
import jax.numpy as jnp
from jax.experimental import pallas as pl
from jax.experimental.pallas import tpu as pltpu


def _round_up(x, m):
    return ((x + m - 1) // m) * m


# ---------------------------------------------------------------------------
# Kernel body: the whole 3-layer MLP on one (tb, d_in) batch tile.
# Per review: no micro-optimization of the body — at these tile sizes neither
# MXU/VPU/EUP slots are near saturation; step count / DMA dominate.
# ---------------------------------------------------------------------------
def mlp_kernel(x_ref, w1_ref, b1_ref, w2_ref, b2_ref, w3_ref, b3_ref, o_ref):
    # fc1 + folded bn1 + relu   (dropout = identity in eval mode)
    h = jnp.dot(x_ref[...], w1_ref[...], preferred_element_type=jnp.float32)
    h = jnp.maximum(h + b1_ref[...], 0.0).astype(jnp.bfloat16)
    # fc2 + folded bn2 + relu
    h = jnp.dot(h, w2_ref[...], preferred_element_type=jnp.float32)
    h = jnp.maximum(h + b2_ref[...], 0.0).astype(jnp.bfloat16)
    # fc3 + bias
    out = jnp.dot(h, w3_ref[...], preferred_element_type=jnp.float32)
    o_ref[...] = (out + b3_ref[...]).astype(o_ref.dtype)


# ---------------------------------------------------------------------------
# Parameter folding / padding (done once, outside the hot path).
# ---------------------------------------------------------------------------
def fold_and_pad_params(params):
    """Fold eval-mode BN affine + linear bias into each layer, zero-pad the hidden /
    output feature dims to multiples of 128 (lane-dense MXU N dims), and cast matmul
    weights to bf16 (biases stay f32).  The input feature dim is NOT padded, so the
    streamed x tiles carry no HBM padding overhead."""
    w1 = params["w1"] * params["s1"]                       # column scale
    b1 = params["b1"] * params["s1"] + params["t1"]
    w2 = params["w2"] * params["s2"]
    b2 = params["b2"] * params["s2"] + params["t2"]
    w3 = params["w3"]
    b3 = params["b3"]

    d_in, h1 = w1.shape
    h2 = w2.shape[1]
    d_out = w3.shape[1]
    h1_p = _round_up(h1, 128)
    h2_p = _round_up(h2, 128)
    d_out_p = _round_up(d_out, 128)

    def pad2(a, r, c):
        return jnp.pad(a, ((0, r - a.shape[0]), (0, c - a.shape[1])))

    folded = dict(
        w1=pad2(w1, d_in, h1_p).astype(jnp.bfloat16),      # rows stay at true d_in
        b1=pad2(b1, 1, h1_p).astype(jnp.float32),
        w2=pad2(w2, h1_p, h2_p).astype(jnp.bfloat16),
        b2=pad2(b2, 1, h2_p).astype(jnp.float32),
        w3=pad2(w3, h2_p, d_out_p).astype(jnp.bfloat16),
        b3=pad2(b3, 1, d_out_p).astype(jnp.float32),
    )
    dims = dict(d_in=d_in, d_out=d_out)
    return folded, dims


# ---------------------------------------------------------------------------
# Tile / VMEM planning (pure Python, generation-aware).
# ---------------------------------------------------------------------------
def _physical_vmem_bytes():
    try:
        cap = int(pltpu.get_tpu_info().vmem_capacity_bytes)
        if cap > 0:
            return cap
    except Exception:
        pass
    return 64 * 1024 * 1024  # conservative fallback (v7x-sized)


def _plan_tiles(B, d_in, h1_p, h2_p, d_out_p, out_dtype, tb_req):
    phys = _physical_vmem_bytes()
    # Scoped-VMEM cap: ~100 MiB on 128 MiB chips (v5e/v6e), ~53 MiB on 64 MiB (v7x).
    vmem_cap = min(100 * 1024 * 1024, int(phys * 0.82))

    out_size = jnp.dtype(out_dtype).itemsize
    # Resident operands (bf16 weights + f32 biases), counted once (Buffered(1)).
    weight_bytes = (d_in * h1_p + h1_p * h2_p + h2_p * d_out_p) * 2 \
        + (h1_p + h2_p + d_out_p) * 4
    # Per batch-row streamed + live bytes: double-buffered x/out tiles plus the
    # f32 accumulator + bf16 activation copies inside the kernel.
    per_row = 2 * d_in * 2 + 2 * d_out_p * out_size \
        + 6 * max(h1_p, h2_p) + 4 * d_out_p

    # 2x on weights tolerates the fallback path where they stay double-buffered.
    budget = vmem_cap - 2 * weight_bytes - (4 << 20)
    if budget > per_row * 16:
        tb_fit = max(16, (budget // per_row) // 16 * 16)
    else:
        tb_fit = 16

    b16 = _round_up(B, 16)
    tb = min(int(tb_req), int(tb_fit), 1024)
    # Keep >=2 grid steps when the batch allows it: v7x's 2 TensorCores only both
    # work if the "parallel" batch axis has >=2 steps to shard.
    if b16 >= 32:
        tb = min(tb, _round_up((b16 + 1) // 2, 16))
    tb = max(16, min(tb, b16))
    tb = (tb // 16) * 16
    return tb, vmem_cap


# ---------------------------------------------------------------------------
# pallas_call construction + jitted forward.
# ---------------------------------------------------------------------------
def _build_call(tb, d_in, h1_p, h2_p, d_out_p, b_p, out_dtype, vmem_limit,
                single_buffer_weights):
    def resident(shape):
        # Constant block index -> stays VMEM-resident across grid steps (no re-DMA).
        # Buffered(1): a second buffer for a never-changing block is pure VMEM waste.
        if single_buffer_weights:
            return pl.BlockSpec(shape, lambda i: (0, 0),
                                pipeline_mode=pl.Buffered(1))
        return pl.BlockSpec(shape, lambda i: (0, 0))

    grid = (b_p // tb,)
    # TODO(synk): if a profile shows exposed x-DMA at large tb, bump only the x
    # BlockSpec to pipeline_mode=pl.Buffered(3).
    return pl.pallas_call(
        mlp_kernel,
        out_shape=jax.ShapeDtypeStruct((b_p, d_out_p), out_dtype),
        grid=grid,
        in_specs=[
            pl.BlockSpec((tb, d_in), lambda i: (i, 0)),     # x: streamed over batch
            resident((d_in, h1_p)), resident((1, h1_p)),
            resident((h1_p, h2_p)), resident((1, h2_p)),
            resident((h2_p, d_out_p)), resident((1, d_out_p)),
        ],
        out_specs=pl.BlockSpec((tb, d_out_p), lambda i: (i, 0)),
        compiler_params=pltpu.CompilerParams(
            dimension_semantics=("parallel",),
            vmem_limit_bytes=int(vmem_limit),
        ),
    )


@functools.partial(
    jax.jit,
    static_argnames=("tb", "d_out", "out_dtype", "vmem_limit",
                     "single_buffer_weights"),
)
def _mlp_forward_jit(x, folded, *, tb, d_out, out_dtype, vmem_limit,
                     single_buffer_weights):
    B, d_in = x.shape
    h1_p = folded["w1"].shape[1]
    h2_p = folded["w2"].shape[1]
    d_out_p = folded["w3"].shape[1]

    b_p = _round_up(B, tb)
    # Only the batch dim is padded; feature width stays true.  Fused under jit with
    # the kernel dispatch (no separate HBM pad/cast pass).
    x_p = jnp.pad(x, ((0, b_p - B), (0, 0))).astype(jnp.bfloat16)

    call = _build_call(tb, d_in, h1_p, h2_p, d_out_p, b_p, out_dtype, vmem_limit,
                       single_buffer_weights)
    out_p = call(x_p, folded["w1"], folded["b1"], folded["w2"], folded["b2"],
                 folded["w3"], folded["b3"])
    return out_p[:B, :d_out]


def mlp_forward(x, folded, dims, *, tb=512, out_dtype=jnp.bfloat16):
    """x: (B, input_dim) float32.  folded/dims from fold_and_pad_params."""
    B, d_in = x.shape
    assert d_in == dims["d_in"]
    h1_p = folded["w1"].shape[1]
    h2_p = folded["w2"].shape[1]
    d_out_p = folded["w3"].shape[1]

    tb_eff, vmem_limit = _plan_tiles(B, d_in, h1_p, h2_p, d_out_p, out_dtype, tb)
    kwargs = dict(tb=tb_eff, d_out=dims["d_out"], out_dtype=out_dtype,
                  vmem_limit=vmem_limit)
    try:
        return _mlp_forward_jit(x, folded, single_buffer_weights=True, **kwargs)
    except Exception:
        # pipeline_mode=pl.Buffered(1) rejected by this jax/Mosaic version ->
        # fall back to default double-buffered resident weights (still correct).
        return _mlp_forward_jit(x, folded, single_buffer_weights=False, **kwargs)


# ---------------------------------------------------------------------------
# Synthetic parameters + references.
# ---------------------------------------------------------------------------
def make_params(key, input_dim, hidden_dim1, hidden_dim2, output_dim, eps=1e-5):
    """Deterministic synthetic parameters matching the PyTorch module's shapes.

    Linear weights are stored transposed: (in_features, out_features).
    BatchNorm1d (eval) is expressed as scale/shift vectors of shape (1, features).
    """
    ks = jax.random.split(key, 16)

    def lin(kw, kb, fan_in, fan_out):
        bound = 1.0 / jnp.sqrt(fan_in)
        w = jax.random.uniform(kw, (fan_in, fan_out), jnp.float32, -bound, bound)
        b = jax.random.uniform(kb, (1, fan_out), jnp.float32, -bound, bound)
        return w, b

    def bn(kg, kb, km, kv, dim):
        gamma = 1.0 + 0.1 * jax.random.normal(kg, (dim,), jnp.float32)
        beta = 0.1 * jax.random.normal(kb, (dim,), jnp.float32)
        running_mean = 0.1 * jax.random.normal(km, (dim,), jnp.float32)
        running_var = jnp.abs(jax.random.normal(kv, (dim,), jnp.float32)) + 0.5
        scale = gamma / jnp.sqrt(running_var + eps)
        shift = beta - running_mean * scale
        return scale.reshape(1, dim), shift.reshape(1, dim)

    w1, b1 = lin(ks[0], ks[1], input_dim, hidden_dim1)
    s1, t1 = bn(ks[2], ks[3], ks[4], ks[5], hidden_dim1)
    w2, b2 = lin(ks[6], ks[7], hidden_dim1, hidden_dim2)
    s2, t2 = bn(ks[8], ks[9], ks[10], ks[11], hidden_dim2)
    w3, b3 = lin(ks[12], ks[13], hidden_dim2, output_dim)

    return dict(w1=w1, b1=b1, s1=s1, t1=t1,
                w2=w2, b2=b2, s2=s2, t2=t2,
                w3=w3, b3=b3)


def mlp_reference_f32(x, p):
    """Full-precision pure-JAX reference (original module semantics, eval mode)."""
    h = x @ p["w1"] + p["b1"]
    h = h * p["s1"] + p["t1"]
    h = jnp.maximum(h, 0.0)
    h = h @ p["w2"] + p["b2"]
    h = h * p["s2"] + p["t2"]
    h = jnp.maximum(h, 0.0)
    return h @ p["w3"] + p["b3"]


def mlp_reference_bf16(x, folded, dims, out_dtype=jnp.bfloat16):
    """Pure-JAX mirror of the kernel's bf16/f32 arithmetic (tight-tolerance check)."""
    xb = x.astype(jnp.bfloat16)
    h = jnp.dot(xb, folded["w1"], preferred_element_type=jnp.float32) + folded["b1"]
    h = jnp.maximum(h, 0.0).astype(jnp.bfloat16)
    h = jnp.dot(h, folded["w2"], preferred_element_type=jnp.float32) + folded["b2"]
    h = jnp.maximum(h, 0.0).astype(jnp.bfloat16)
    out = jnp.dot(h, folded["w3"], preferred_element_type=jnp.float32) + folded["b3"]
    return out[:, : dims["d_out"]].astype(out_dtype)


if __name__ == "__main__":
    input_dim, hidden_dim1, hidden_dim2, output_dim = 32, 64, 32, 16
    batch = 8

    key = jax.random.PRNGKey(0)
    k_x, k_p = jax.random.split(key)
    x = jax.random.normal(k_x, (batch, input_dim), jnp.float32)
    params = make_params(k_p, input_dim, hidden_dim1, hidden_dim2, output_dim)

    folded, dims = fold_and_pad_params(params)

    out = mlp_forward(x, folded, dims)
    out = jax.block_until_ready(out)
    assert out.shape == (batch, output_dim)

    # Tight check against a pure-JAX mirror of the kernel's exact bf16/f32 math.
    ref_bf16 = mlp_reference_bf16(x, folded, dims)
    assert jnp.allclose(out.astype(jnp.float32), ref_bf16.astype(jnp.float32),
                        atol=2e-2, rtol=2e-2), "mismatch vs bf16 mirror"

    # Loose check against full-precision module semantics (bf16 weights/activations/out).
    ref_f32 = mlp_reference_f32(x, params)
    assert jnp.allclose(out.astype(jnp.float32), ref_f32,
                        atol=1.5e-1, rtol=1.5e-1), "mismatch vs f32 reference"

    print("KERNEL_OK")
</pallas_src>

<mosaic_0001>
module attributes {stable_mosaic.version = 11 : i64} {
  func.func @mlp_kernel(%arg0: i32, %arg1: memref<16x32xbf16, #tpu.memory_space<vmem>>, %arg2: memref<32x128xbf16, #tpu.memory_space<vmem>>, %arg3: memref<1x128xf32, #tpu.memory_space<vmem>>, %arg4: memref<128x128xbf16, #tpu.memory_space<vmem>>, %arg5: memref<1x128xf32, #tpu.memory_space<vmem>>, %arg6: memref<128x128xbf16, #tpu.memory_space<vmem>>, %arg7: memref<1x128xf32, #tpu.memory_space<vmem>>, %arg8: memref<16x128xbf16, #tpu.memory_space<vmem>>) attributes {dimension_semantics = [#tpu.dimension_semantics<parallel>], iteration_bounds = array<i64: 1>, scalar_prefetch = 0 : i64, scratch_operands = 0 : i64, tpu.core_type = #tpu.core_type<tc>, window_params = [{transform_indices = @transform_0, window_bounds = array<i64: 16, 32>}, {pipeline_mode = #tpu.pipeline_mode<synchronous>, transform_indices = @transform_1, window_bounds = array<i64: 32, 128>}, {pipeline_mode = #tpu.pipeline_mode<synchronous>, transform_indices = @transform_2, window_bounds = array<i64: 1, 128>}, {pipeline_mode = #tpu.pipeline_mode<synchronous>, transform_indices = @transform_3, window_bounds = array<i64: 128, 128>}, {pipeline_mode = #tpu.pipeline_mode<synchronous>, transform_indices = @transform_4, window_bounds = array<i64: 1, 128>}, {pipeline_mode = #tpu.pipeline_mode<synchronous>, transform_indices = @transform_5, window_bounds = array<i64: 128, 128>}, {pipeline_mode = #tpu.pipeline_mode<synchronous>, transform_indices = @transform_6, window_bounds = array<i64: 1, 128>}, {transform_indices = @transform_7, window_bounds = array<i64: 16, 128>}]} {
    %c0 = arith.constant 0 : index
    %c0_0 = arith.constant 0 : index
    %0 = vector.load %arg1[%c0, %c0_0] : memref<16x32xbf16, #tpu.memory_space<vmem>>, vector<16x32xbf16>
    %c0_1 = arith.constant 0 : index
    %c0_2 = arith.constant 0 : index
    %1 = vector.load %arg2[%c0_1, %c0_2] : memref<32x128xbf16, #tpu.memory_space<vmem>>, vector<32x128xbf16>
    %cst = arith.constant dense<0.000000e+00> : vector<16x128xf32>
    %2 = tpu.matmul %0, %1, %cst {dimension_numbers = #tpu.dot_dimension_numbers<[1], [0], [0], [1], [0, 0, 1, 1], [], []>} : vector<16x32xbf16>, vector<32x128xbf16>, vector<16x128xf32> -> vector<16x128xf32>
    %c0_3 = arith.constant 0 : index
    %c0_4 = arith.constant 0 : index
    %3 = vector.load %arg3[%c0_3, %c0_4] : memref<1x128xf32, #tpu.memory_space<vmem>>, vector<1x128xf32>
    %4 = vector.broadcast %3 : vector<1x128xf32> to vector<16x128xf32>
    %5 = arith.addf %2, %4 : vector<16x128xf32>
    %cst_5 = arith.constant 0.000000e+00 : f32
    %6 = vector.broadcast %cst_5 : f32 to vector<16x128xf32>
    %7 = arith.maximumf %5, %6 : vector<16x128xf32>
    %8 = arith.truncf %7 : vector<16x128xf32> to vector<16x128xbf16>
    %c0_6 = arith.constant 0 : index
    %c0_7 = arith.constant 0 : index
    %9 = vector.load %arg4[%c0_6, %c0_7] : memref<128x128xbf16, #tpu.memory_space<vmem>>, vector<128x128xbf16>
    %cst_8 = arith.constant dense<0.000000e+00> : vector<16x128xf32>
    %10 = tpu.matmul %8, %9, %cst_8 {dimension_numbers = #tpu.dot_dimension_numbers<[1], [0], [0], [1], [0, 0, 1, 1], [], []>} : vector<16x128xbf16>, vector<128x128xbf16>, vector<16x128xf32> -> vector<16x128xf32>
    %c0_9 = arith.constant 0 : index
    %c0_10 = arith.constant 0 : index
    %11 = vector.load %arg5[%c0_9, %c0_10] : memref<1x128xf32, #tpu.memory_space<vmem>>, vector<1x128xf32>
    %12 = vector.broadcast %11 : vector<1x128xf32> to vector<16x128xf32>
    %13 = arith.addf %10, %12 : vector<16x128xf32>
    %cst_11 = arith.constant 0.000000e+00 : f32
    %14 = vector.broadcast %cst_11 : f32 to vector<16x128xf32>
    %15 = arith.maximumf %13, %14 : vector<16x128xf32>
    %16 = arith.truncf %15 : vector<16x128xf32> to vector<16x128xbf16>
    %c0_12 = arith.constant 0 : index
    %c0_13 = arith.constant 0 : index
    %17 = vector.load %arg6[%c0_12, %c0_13] : memref<128x128xbf16, #tpu.memory_space<vmem>>, vector<128x128xbf16>
    %cst_14 = arith.constant dense<0.000000e+00> : vector<16x128xf32>
    %18 = tpu.matmul %16, %17, %cst_14 {dimension_numbers = #tpu.dot_dimension_numbers<[1], [0], [0], [1], [0, 0, 1, 1], [], []>} : vector<16x128xbf16>, vector<128x128xbf16>, vector<16x128xf32> -> vector<16x128xf32>
    %c0_15 = arith.constant 0 : index
    %c0_16 = arith.constant 0 : index
    %19 = vector.load %arg7[%c0_15, %c0_16] : memref<1x128xf32, #tpu.memory_space<vmem>>, vector<1x128xf32>
    %20 = vector.broadcast %19 : vector<1x128xf32> to vector<16x128xf32>
    %21 = arith.addf %18, %20 : vector<16x128xf32>
    %22 = arith.truncf %21 : vector<16x128xf32> to vector<16x128xbf16>
    %c0_17 = arith.constant 0 : index
    %c0_18 = arith.constant 0 : index
    %23 = vector.load %arg8[%c0_17, %c0_18] : memref<16x128xbf16, #tpu.memory_space<vmem>>, vector<16x128xbf16>
    tpu.vector_store %arg8[%c0_17, %c0_18], %22 {strides = array<i32>} : memref<16x128xbf16, #tpu.memory_space<vmem>>, vector<16x128xbf16>,
    return
  }
  func.func @transform_0(%arg0: i32) -> (i32, i32) {
    %c0_i32 = arith.constant 0 : i32
    %c0_i32_0 = arith.constant 0 : i32
    return %arg0, %c0_i32 : i32, i32
  }
  func.func @transform_1(%arg0: i32) -> (i32, i32) {
    %c0_i32 = arith.constant 0 : i32
    %c0_i32_0 = arith.constant 0 : i32
    %c0_i32_1 = arith.constant 0 : i32
    return %c0_i32, %c0_i32_0 : i32, i32
  }
  func.func @transform_2(%arg0: i32) -> (i32, i32) {
    %c0_i32 = arith.constant 0 : i32
    %c0_i32_0 = arith.constant 0 : i32
    %c0_i32_1 = arith.constant 0 : i32
    return %c0_i32, %c0_i32_0 : i32, i32
  }
  func.func @transform_3(%arg0: i32) -> (i32, i32) {
    %c0_i32 = arith.constant 0 : i32
    %c0_i32_0 = arith.constant 0 : i32
    %c0_i32_1 = arith.constant 0 : i32
    return %c0_i32, %c0_i32_0 : i32, i32
  }
  func.func @transform_4(%arg0: i32) -> (i32, i32) {
    %c0_i32 = arith.constant 0 : i32
    %c0_i32_0 = arith.constant 0 : i32
    %c0_i32_1 = arith.constant 0 : i32
    return %c0_i32, %c0_i32_0 : i32, i32
  }
  func.func @transform_5(%arg0: i32) -> (i32, i32) {
    %c0_i32 = arith.constant 0 : i32
    %c0_i32_0 = arith.constant 0 : i32
    %c0_i32_1 = arith.constant 0 : i32
    return %c0_i32, %c0_i32_0 : i32, i32
  }
  func.func @transform_6(%arg0: i32) -> (i32, i32) {
    %c0_i32 = arith.constant 0 : i32
    %c0_i32_0 = arith.constant 0 : i32
    %c0_i32_1 = arith.constant 0 : i32
    return %c0_i32, %c0_i32_0 : i32, i32
  }
  func.func @transform_7(%arg0: i32) -> (i32, i32) {
    %c0_i32 = arith.constant 0 : i32
    %c0_i32_0 = arith.constant 0 : i32
    return %arg0, %c0_i32 : i32, i32
  }
}

module attributes {stable_mosaic.version = 11 : i64} {
  func.func @mlp_kernel(%arg0: i32, %arg1: memref<16x32xbf16, #tpu.memory_space<vmem>>, %arg2: memref<32x128xbf16, #tpu.memory_space<vmem>>, %arg3: memref<1x128xf32, #tpu.memory_space<vmem>>, %arg4: memref<128x128xbf16, #tpu.memory_space<vmem>>, %arg5: memref<1x128xf32, #tpu.memory_space<vmem>>, %arg6: memref<128x128xbf16, #tpu.memory_space<vmem>>, %arg7: memref<1x128xf32, #tpu.memory_space<vmem>>, %arg8: memref<16x128xbf16, #tpu.memory_space<vmem>>) attributes {dimension_semantics = [#tpu.dimension_semantics<parallel>], iteration_bounds = array<i64: 1>, scalar_prefetch = 0 : i64, scratch_operands = 0 : i64, tpu.core_type = #tpu.core_type<tc>, window_params = [{transform_indices = @transform_0, window_bounds = array<i64: 16, 32>}, {pipeline_mode = #tpu.pipeline_mode<synchronous>, transform_indices = @transform_1, window_bounds = array<i64: 32, 128>}, {pipeline_mode = #tpu.pipeline_mode<synchronous>, transform_indices = @transform_2, window_bounds = array<i64: 1, 128>}, {pipeline_mode = #tpu.pipeline_mode<synchronous>, transform_indices = @transform_3, window_bounds = array<i64: 128, 128>}, {pipeline_mode = #tpu.pipeline_mode<synchronous>, transform_indices = @transform_4, window_bounds = array<i64: 1, 128>}, {pipeline_mode = #tpu.pipeline_mode<synchronous>, transform_indices = @transform_5, window_bounds = array<i64: 128, 128>}, {pipeline_mode = #tpu.pipeline_mode<synchronous>, transform_indices = @transform_6, window_bounds = array<i64: 1, 128>}, {transform_indices = @transform_7, window_bounds = array<i64: 16, 128>}]} {
    %c0 = arith.constant 0 : index
    %c0_0 = arith.constant 0 : index
    %0 = vector.load %arg1[%c0, %c0_0] : memref<16x32xbf16, #tpu.memory_space<vmem>>, vector<16x32xbf16>
    %c0_1 = arith.constant 0 : index
    %c0_2 = arith.constant 0 : index
    %1 = vector.load %arg2[%c0_1, %c0_2] : memref<32x128xbf16, #tpu.memory_space<vmem>>, vector<32x128xbf16>
    %cst = arith.constant dense<0.000000e+00> : vector<16x128xf32>
    %2 = tpu.matmul %0, %1, %cst {dimension_numbers = #tpu.dot_dimension_numbers<[1], [0], [0], [1], [0, 0, 1, 1], [], []>} : vector<16x32xbf16>, vector<32x128xbf16>, vector<16x128xf32> -> vector<16x128xf32>
    %c0_3 = arith.constant 0 : index
    %c0_4 = arith.constant 0 : index
    %3 = vector.load %arg3[%c0_3, %c0_4] : memref<1x128xf32, #tpu.memory_space<vmem>>, vector<1x128xf32>
    %4 = vector.broadcast %3 : vector<1x128xf32> to vector<16x128xf32>
    %5 = arith.addf %2, %4 : vector<16x128xf32>
    %cst_5 = arith.constant 0.000000e+00 : f32
    %6 = vector.broadcast %cst_5 : f32 to vector<16x128xf32>
    %7 = arith.maximumf %5, %6 : vector<16x128xf32>
    %8 = arith.truncf %7 : vector<16x128xf32> to vector<16x128xbf16>
    %c0_6 = arith.constant 0 : index
    %c0_7 = arith.constant 0 : index
    %9 = vector.load %arg4[%c0_6, %c0_7] : memref<128x128xbf16, #tpu.memory_space<vmem>>, vector<128x128xbf16>
    %cst_8 = arith.constant dense<0.000000e+00> : vector<16x128xf32>
    %10 = tpu.matmul %8, %9, %cst_8 {dimension_numbers = #tpu.dot_dimension_numbers<[1], [0], [0], [1], [0, 0, 1, 1], [], []>} : vector<16x128xbf16>, vector<128x128xbf16>, vector<16x128xf32> -> vector<16x128xf32>
    %c0_9 = arith.constant 0 : index
    %c0_10 = arith.constant 0 : index
    %11 = vector.load %arg5[%c0_9, %c0_10] : memref<1x128xf32, #tpu.memory_space<vmem>>, vector<1x128xf32>
    %12 = vector.broadcast %11 : vector<1x128xf32> to vector<16x128xf32>
    %13 = arith.addf %10, %12 : vector<16x128xf32>
    %cst_11 = arith.constant 0.000000e+00 : f32
    %14 = vector.broadcast %cst_11 : f32 to vector<16x128xf32>
    %15 = arith.maximumf %13, %14 : vector<16x128xf32>
    %16 = arith.truncf %15 : vector<16x128xf32> to vector<16x128xbf16>
    %c0_12 = arith.constant 0 : index
    %c0_13 = arith.constant 0 : index
    %17 = vector.load %arg6[%c0_12, %c0_13] : memref<128x128xbf16, #tpu.memory_space<vmem>>, vector<128x128xbf16>
    %cst_14 = arith.constant dense<0.000000e+00> : vector<16x128xf32>
    %18 = tpu.matmul %16, %17, %cst_14 {dimension_numbers = #tpu.dot_dimension_numbers<[1], [0], [0], [1], [0, 0, 1, 1], [], []>} : vector<16x128xbf16>, vector<128x128xbf16>, vector<16x128xf32> -> vector<16x128xf32>
    %c0_15 = arith.constant 0 : index
    %c0_16 = arith.constant 0 : index
    %19 = vector.load %arg7[%c0_15, %c0_16] : memref<1x128xf32, #tpu.memory_space<vmem>>, vector<1x128xf32>
    %20 = vector.broadcast %19 : vector<1x128xf32> to vector<16x128xf32>
    %21 = arith.addf %18, %20 : vector<16x128xf32>
    %22 = arith.truncf %21 : vector<16x128xf32> to vector<16x128xbf16>
    %c0_17 = arith.constant 0 : index
    %c0_18 = arith.constant 0 : index
    %23 = vector.load %arg8[%c0_17, %c0_18] : memref<16x128xbf16, #tpu.memory_space<vmem>>, vector<16x128xbf16>
    tpu.vector_store %arg8[%c0_17, %c0_18], %22 {strides = array<i32>} : memref<16x128xbf16, #tpu.memory_space<vmem>>, vector<16x128xbf16>,
    return
  }
  func.func @transform_0(%arg0: i32) -> (i32, i32) {
    %c0_i32 = arith.constant 0 : i32
    %c0_i32_0 = arith.constant 0 : i32
    return %arg0, %c0_i32 : i32, i32
  }
  func.func @transform_1(%arg0: i32) -> (i32, i32) {
    %c0_i32 = arith.constant 0 : i32
    %c0_i32_0 = arith.constant 0 : i32
    %c0_i32_1 = arith.constant 0 : i32
    return %c0_i32, %c0_i32_0 : i32, i32
  }
  func.func @transform_2(%arg0: i32) -> (i32, i32) {
    %c0_i32 = arith.constant 0 : i32
    %c0_i32_0 = arith.constant 0 : i32
    %c0_i32_1 = arith.constant 0 : i32
    return %c0_i32, %c0_i32_0 : i32, i32
  }
  func.func @transform_3(%arg0: i32) -> (i32, i32) {
    %c0_i32 = arith.constant 0 : i32
    %c0_i32_0 = arith.constant 0 : i32
    %c0_i32_1 = arith.constant 0 : i32
    return %c0_i32, %c0_i32_0 : i32, i32
  }
  func.func @transform_4(%arg0: i32) -> (i32, i32) {
    %c0_i32 = arith.constant 0 : i32
    %c0_i32_0 = arith.constant 0 : i32
    %c0_i32_1 = arith.constant 0 : i32
    return %c0_i32, %c0_i32_0 : i32, i32
  }
  func.func @transform_5(%arg0: i32) -> (i32, i32) {
    %c0_i32 = arith.constant 0 : i32
    %c0_i32_0 = arith.constant 0 : i32
    %c0_i32_1 = arith.constant 0 : i32
    return %c0_i32, %c0_i32_0 : i32, i32
  }
  func.func @transform_6(%arg0: i32) -> (i32, i32) {
    %c0_i32 = arith.constant 0 : i32
    %c0_i32_0 = arith.constant 0 : i32
    %c0_i32_1 = arith.constant 0 : i32
    return %c0_i32, %c0_i32_0 : i32, i32
  }
  func.func @transform_7(%arg0: i32) -> (i32, i32) {
    %c0_i32 = arith.constant 0 : i32
    %c0_i32_0 = arith.constant 0 : i32
    return %arg0, %c0_i32 : i32, i32
  }
}

</mosaic_0001>

<llo_original>
// kernel: _mlp_forward_jit.1
$region0: #{_mlp_forward_jit.1}
  #allocation0 [shape = 'u32[]', space=smem, size = 0x4, offset = 0x4, fixed_abs, tag = 'smem constant byte address 0x4 - core index']
  #allocation1 [shape = 'u32[144,128]{1,0:T(1,128)}', space=vmem, size = 0x12000, scoped, tag = 'internal scratch']
  %s0 = inlined_call_operand.vmem [shape: bf16[16,32], index: 0, kind: input, shape index: {}]
  %s1 = inlined_call_operand.vmem [shape: bf16[32,128], index: 1, kind: input, shape index: {}]
  %s2 = inlined_call_operand.vmem [shape: f32[1,128], index: 2, kind: input, shape index: {}]
  %s3 = inlined_call_operand.hbm [shape: bf16[128,128], index: 3, kind: input, shape index: {}]
  %s4 = inlined_call_operand.vmem [shape: f32[1,128], index: 4, kind: input, shape index: {}]
  %s5 = inlined_call_operand.hbm [shape: bf16[128,128], index: 5, kind: input, shape index: {}]
  %s6 = inlined_call_operand.vmem [shape: f32[1,128], index: 6, kind: input, shape index: {}]
  %s7 = inlined_call_operand.vmem [shape: bf16[16,128], index: 7, kind: output, shape index: {}]
  %s8 = sld [smem:[#allocation0]]
  $region46: #{_mlp_forward_jit.1} parent=0
    _
  %s10 = ssub.s32 1, %s8
  %s11 = scalar_select 0, %s10, %s8
  $region1: #{_mlp_forward_jit.1} parent=0
    #allocation2 [shape = 'u8[32768]{0}', space=vmem, size = 0x8000, scoped, tag = 'input window, operand 3, single buffered']
    #allocation3 [shape = 's32[1]{0}', space=sflag, size = 0x4, scoped, tag = 'scoped memory for _mlp_forward_jit.1']
    #allocation4 [shape = 'u8[32768]{0}', space=vmem, size = 0x8000, scoped, tag = 'input window, operand 5, single buffered']
    #allocation5 [shape = 's32[1]{0}', space=sflag, size = 0x4, scoped, tag = 'scoped memory for _mlp_forward_jit.1']
    %12 = vsyncpa [#allocation3], 0
    %13 = vsyncpa [#allocation5], 0
    // Predicated region
    $region2: #{_mlp_forward_jit.1} parent=1 // pred_check
      _
    $region3: #{_mlp_forward_jit.1} parent=1 // pred_check_branch
      %15 = sbr.rel (0) target = $region5
    $region4: #{_mlp_forward_jit.1} parent=1 // pred_region
      _
    $region5: #{_mlp_forward_jit.1} parent=1 // pred_fallthru
      _
    // Predicated region
    $region6: #{_mlp_forward_jit.1} parent=1 // pred_check
      _
    $region7: #{_mlp_forward_jit.1} parent=1 // pred_check_branch
      %17 = sbr.rel (0) target = $region9
    $region8: #{_mlp_forward_jit.1} parent=1 // pred_region
      _
    $region9: #{_mlp_forward_jit.1} parent=1 // pred_fallthru
      _
    // Predicated region
    $region10: #{_mlp_forward_jit.1} parent=1 // pred_check
      _
    $region11: #{_mlp_forward_jit.1} parent=1 // pred_check_branch
      %19 = sbr.rel (0) target = $region13
    $region12: #{_mlp_forward_jit.1} parent=1 // pred_region
      _
    $region13: #{_mlp_forward_jit.1} parent=1 // pred_fallthru
      _
    // Predicated region
    $region14: #{_mlp_forward_jit.1} parent=1 // pred_check
      _
    $region15: #{_mlp_forward_jit.1} parent=1 // pred_check_branch
      %21 = sbr.rel (0) target = $region17
    $region16: #{_mlp_forward_jit.1} parent=1 // pred_region
      %s23 = ssub.s32 1024, 1024
      %24 = vsyncadd [#allocation3], %s23
      %s25 = sshll.u32 [#allocation2], 4
      %s26 = int_to_ptr.vmem [resolvable:$true] %s25
      %31 = dma.hbm_to_vmem [thread:$0]  %s3, 1024, %s26, [#allocation3], 64, 64, 4
    $region17: #{_mlp_forward_jit.1} parent=1 // pred_fallthru
      _
    // Predicated region
    $region18: #{_mlp_forward_jit.1} parent=1 // pred_check
      _
    $region19: #{_mlp_forward_jit.1} parent=1 // pred_check_branch
      %33 = sbr.rel (0) target = $region21
    $region20: #{_mlp_forward_jit.1} parent=1 // pred_region
      _
    $region21: #{_mlp_forward_jit.1} parent=1 // pred_fallthru
      _
    // Predicated region
    $region22: #{_mlp_forward_jit.1} parent=1 // pred_check
      _
    $region23: #{_mlp_forward_jit.1} parent=1 // pred_check_branch
      %35 = sbr.rel (0) target = $region25
    $region24: #{_mlp_forward_jit.1} parent=1 // pred_region
      %s37 = ssub.s32 1024, 1024
      %38 = vsyncadd [#allocation5], %s37
      %s39 = sshll.u32 [#allocation4], 4
      %s40 = int_to_ptr.vmem [resolvable:$true] %s39
      %45 = dma.hbm_to_vmem [thread:$0]  %s5, 1024, %s40, [#allocation5], 64, 64, 4
    $region25: #{_mlp_forward_jit.1} parent=1 // pred_fallthru
      _
    // Predicated region
    $region26: #{_mlp_forward_jit.1} parent=1 // pred_check
      _
    $region27: #{_mlp_forward_jit.1} parent=1 // pred_check_branch
      %47 = sbr.rel (0) target = $region29
    $region28: #{_mlp_forward_jit.1} parent=1 // pred_region
      _
    $region29: #{_mlp_forward_jit.1} parent=1 // pred_fallthru
      _
    // Predicated region
    $region30: #{_mlp_forward_jit.1} parent=1 // pred_check
      _
    $region31: #{_mlp_forward_jit.1} parent=1 // pred_check_branch
      %49 = sbr.rel (0) target = $region33
    $region32: #{_mlp_forward_jit.1} parent=1 // pred_region
      %50 = dma.done [#allocation3], 1024
    $region33: #{_mlp_forward_jit.1} parent=1 // pred_fallthru
      _
    // Predicated region
    $region34: #{_mlp_forward_jit.1} parent=1 // pred_check
      _
    $region35: #{_mlp_forward_jit.1} parent=1 // pred_check_branch
      %52 = sbr.rel (0) target = $region37
    $region36: #{_mlp_forward_jit.1} parent=1 // pred_region
      %53 = dma.done [#allocation5], 1024
    $region37: #{_mlp_forward_jit.1} parent=1 // pred_fallthru
      _
    %v55 = vld [vmem:[%s0] sm:$0xf]
    %v56 = vld [vmem:[%s0 + $0x4] sm:$0xf]
    %v57 = vld [vmem:[%s1] sm:$0xf]
    %v58 = vld [vmem:[%s1 + $0x4] sm:$0xf]
    %v59 = vld [vmem:[%s1 + $0x8] sm:$0xf]
    %v60 = vld [vmem:[%s1 + $0xc] sm:$0xf]
    %v61 = vld [vmem:[%s2] sm:$0x1]
    %v63 = vlaneseq
    %v64 = vshrl.u32 %v63, 7
    %v65 = vsub.s32 0, %v64
    %v66 = vrot.slane %v61, %v65
    %v70 = vunpack.c.l.b16 %v55
    %v71 = vunpack.c.l.b16 %v56
    %v72 = vpack.c.b16 %v71, %v70
    %v77 = vunpack.c.l.b16 %v57
    %v78 = vunpack.c.l.b16 %v58
    %v79 = vunpack.c.l.b16 %v59
    %v80 = vunpack.c.l.b16 %v60
    %v81 = vpack.c.b16 %v78, %v77
    %v82 = vpack.c.b16 %v80, %v79
    %vm85 = vcmask 261120
    %v87 = vsel %vm85, %v72, 0
    %89 = vmatprep.subr.bf16.mxu0 0
    %90 = vmatpush1.bf16.msra.mxu0 %v81
    %91 = vmatprep.subr.bf16.mxu0 0
    %92 = vmatpush1.bf16.msra.mxu0 %v82
    %93 = vmatprep.subr.bf16.mxu0 0
    %94 = vmatpush1.bf16.msra.mxu0 0
    %95 = vmatprep.subr.bf16.mxu0 0
    %96 = vmatpush1.bf16.msra.mxu0 0
    %97 = vmatprep.subr.bf16.mxu0 0
    %98 = vmatpush1.bf16.msra.mxu0 0
    %99 = vmatprep.subr.bf16.mxu0 0
    %100 = vmatpush1.bf16.msra.mxu0 0
    %101 = vmatprep.subr.bf16.mxu0 0
    %102 = vmatpush1.bf16.msra.mxu0 0
    %103 = vmatprep.subr.bf16.mxu0 0
    %104 = vmatpush1.bf16.msra.mxu0 0
    %105 = vmatprep.subr.bf16.mxu0 0
    %106 = vmatpush1.bf16.msra.mxu0 0
    %107 = vmatprep.subr.bf16.mxu0 0
    %108 = vmatpush1.bf16.msra.mxu0 0
    %109 = vmatprep.subr.bf16.mxu0 0
    %110 = vmatpush1.bf16.msra.mxu0 0
    %111 = vmatprep.subr.bf16.mxu0 0
    %112 = vmatpush1.bf16.msra.mxu0 0
    %113 = vmatprep.subr.bf16.mxu0 0
    %114 = vmatpush1.bf16.msra.mxu0 0
    %115 = vmatprep.subr.bf16.mxu0 0
    %116 = vmatpush1.bf16.msra.mxu0 0
    %117 = vmatprep.subr.bf16.mxu0 0
    %118 = vmatpush1.bf16.msra.mxu0 0
    %119 = vmatprep.subr.bf16.mxu0 0
    %120 = vmatpush1.bf16.msra.mxu0 0
    %121 = vmatprep.mubr.bf16.mxu0 0
    %122 = vmatmul.mubr.bf16.gmra.mrb[0].mxu0 %v87
    %v123 = vpop.f32.mrb[0].mxu0
    %v124 = vadd.f32 %v66, %v123
    %v125 = vpop.f32.mrb[0].mxu0
    %v126 = vpop.f32.mrb[0].mxu0
    %v127 = vadd.f32 %v66, %v126
    %v128 = vpop.f32.mrb[0].mxu0
    %129 = vdwg.mxu0
    %v130 = vmax.f32 %v124, 0.0
    %v131 = vmax.f32 %v127, 0.0
    %v132 = vpack.c.bf16 %v131, %v130
    %v133 = vld [vmem:[#allocation2] sm:$0xf]
    %v134 = vld [vmem:[#allocation2 + $0x4] sm:$0xf]
    %v135 = vld [vmem:[#allocation2 + $0x8] sm:$0xf]
    %v136 = vld [vmem:[#allocation2 + $0xc] sm:$0xf]
    %v137 = vld [vmem:[#allocation2 + $0x10] sm:$0xf]
    %v138 = vld [vmem:[#allocation2 + $0x14] sm:$0xf]
    %v139 = vld [vmem:[#allocation2 + $0x18] sm:$0xf]
    %v140 = vld [vmem:[#allocation2 + $0x1c] sm:$0xf]
    %v141 = vld [vmem:[#allocation2 + $0x20] sm:$0xf]
    %v142 = vld [vmem:[#allocation2 + $0x24] sm:$0xf]
    %v143 = vld [vmem:[#allocation2 + $0x28] sm:$0xf]
    %v144 = vld [vmem:[#allocation2 + $0x2c] sm:$0xf]
    %v145 = vld [vmem:[#allocation2 + $0x30] sm:$0xf]
    %v146 = vld [vmem:[#allocation2 + $0x34] sm:$0xf]
    %v147 = vld [vmem:[#allocation2 + $0x38] sm:$0xf]
    %v148 = vld [vmem:[#allocation2 + $0x3c] sm:$0xf]
    %v149 = vld [vmem:[%s4] sm:$0x1]
    %v151 = vlaneseq
    %v152 = vshrl.u32 %v151, 7
    %v153 = vsub.s32 0, %v152
    %v154 = vrot.slane %v149, %v153
    %v172 = vunpack.c.l.b16 %v133
    %v173 = vunpack.c.l.b16 %v134
    %v174 = vunpack.c.l.b16 %v135
    %v175 = vunpack.c.l.b16 %v136
    %v176 = vunpack.c.l.b16 %v137
    %v177 = vunpack.c.l.b16 %v138
    %v178 = vunpack.c.l.b16 %v139
    %v179 = vunpack.c.l.b16 %v140
    %v180 = vunpack.c.l.b16 %v141
    %v181 = vunpack.c.l.b16 %v142
    %v182 = vunpack.c.l.b16 %v143
    %v183 = vunpack.c.l.b16 %v144
    %v184 = vunpack.c.l.b16 %v145
    %v185 = vunpack.c.l.b16 %v146
    %v186 = vunpack.c.l.b16 %v147
    %v187 = vunpack.c.l.b16 %v148
    %v188 = vpack.c.b16 %v173, %v172
    %v189 = vpack.c.b16 %v175, %v174
    %v190 = vpack.c.b16 %v177, %v176
    %v191 = vpack.c.b16 %v179, %v178
    %v192 = vpack.c.b16 %v181, %v180
    %v193 = vpack.c.b16 %v183, %v182
    %v194 = vpack.c.b16 %v185, %v184
    %v195 = vpack.c.b16 %v187, %v186
    %204 = vmatprep.subr.bf16.mxu0 0
    %205 = vmatpush1.bf16.msra.mxu0 %v188
    %206 = vmatprep.subr.bf16.mxu0 0
    %207 = vmatpush1.bf16.msra.mxu0 %v189
    %208 = vmatprep.subr.bf16.mxu0 0
    %209 = vmatpush1.bf16.msra.mxu0 %v190
    %210 = vmatprep.subr.bf16.mxu0 0
    %211 = vmatpush1.bf16.msra.mxu0 %v191
    %212 = vmatprep.subr.bf16.mxu0 0
    %213 = vmatpush1.bf16.msra.mxu0 %v192
    %214 = vmatprep.subr.bf16.mxu0 0
    %215 = vmatpush1.bf16.msra.mxu0 %v193
    %216 = vmatprep.subr.bf16.mxu0 0
    %217 = vmatpush1.bf16.msra.mxu0 %v194
    %218 = vmatprep.subr.bf16.mxu0 0
    %219 = vmatpush1.bf16.msra.mxu0 %v195
    %220 = vmatprep.subr.bf16.mxu0 0
    %221 = vmatpush1.bf16.msra.mxu0 0
    %222 = vmatprep.subr.bf16.mxu0 0
    %223 = vmatpush1.bf16.msra.mxu0 0
    %224 = vmatprep.subr.bf16.mxu0 0
    %225 = vmatpush1.bf16.msra.mxu0 0
    %226 = vmatprep.subr.bf16.mxu0 0
    %227 = vmatpush1.bf16.msra.mxu0 0
    %228 = vmatprep.subr.bf16.mxu0 0
    %229 = vmatpush1.bf16.msra.mxu0 0
    %230 = vmatprep.subr.bf16.mxu0 0
    %231 = vmatpush1.bf16.msra.mxu0 0
    %232 = vmatprep.subr.bf16.mxu0 0
    %233 = vmatpush1.bf16.msra.mxu0 0
    %234 = vmatprep.subr.bf16.mxu0 0
    %235 = vmatpush1.bf16.msra.mxu0 0
    %236 = vmatprep.mubr.bf16.mxu0 0
    %237 = vmatmul.mubr.bf16.gmra.mrb[0].mxu0 %v132
    %v238 = vpop.f32.mrb[0].mxu0
    %v239 = vadd.f32 %v154, %v238
    %v240 = vpop.f32.mrb[0].mxu0
    %v241 = vpop.f32.mrb[0].mxu0
    %v242 = vadd.f32 %v154, %v241
    %v243 = vpop.f32.mrb[0].mxu0
    %244 = vdwg.mxu0
    %v245 = vmax.f32 %v239, 0.0
    %v246 = vmax.f32 %v242, 0.0
    %v247 = vpack.c.bf16 %v246, %v245
    %v248 = vld [vmem:[#allocation4] sm:$0xf]
    %v249 = vld [vmem:[#allocation4 + $0x4] sm:$0xf]
    %v250 = vld [vmem:[#allocation4 + $0x8] sm:$0xf]
    %v251 = vld [vmem:[#allocation4 + $0xc] sm:$0xf]
    %v252 = vld [vmem:[#allocation4 + $0x10] sm:$0xf]
    %v253 = vld [vmem:[#allocation4 + $0x14] sm:$0xf]
    %v254 = vld [vmem:[#allocation4 + $0x18] sm:$0xf]
    %v255 = vld [vmem:[#allocation4 + $0x1c] sm:$0xf]
    %v256 = vld [vmem:[#allocation4 + $0x20] sm:$0xf]
    %v257 = vld [vmem:[#allocation4 + $0x24] sm:$0xf]
    %v258 = vld [vmem:[#allocation4 + $0x28] sm:$0xf]
    %v259 = vld [vmem:[#allocation4 + $0x2c] sm:$0xf]
    %v260 = vld [vmem:[#allocation4 + $0x30] sm:$0xf]
    %v261 = vld [vmem:[#allocation4 + $0x34] sm:$0xf]
    %v262 = vld [vmem:[#allocation4 + $0x38] sm:$0xf]
    %v263 = vld [vmem:[#allocation4 + $0x3c] sm:$0xf]
    %v264 = vld [vmem:[%s6] sm:$0x1]
    %v266 = vlaneseq
    %v267 = vshrl.u32 %v266, 7
    %v268 = vsub.s32 0, %v267
    %v269 = vrot.slane %v264, %v268
    %v287 = vunpack.c.l.b16 %v248
    %v288 = vunpack.c.l.b16 %v249
    %v289 = vunpack.c.l.b16 %v250
    %v290 = vunpack.c.l.b16 %v251
    %v291 = vunpack.c.l.b16 %v252
    %v292 = vunpack.c.l.b16 %v253
    %v293 = vunpack.c.l.b16 %v254
    %v294 = vunpack.c.l.b16 %v255
    %v295 = vunpack.c.l.b16 %v256
    %v296 = vunpack.c.l.b16 %v257
    %v297 = vunpack.c.l.b16 %v258
    %v298 = vunpack.c.l.b16 %v259
    %v299 = vunpack.c.l.b16 %v260
    %v300 = vunpack.c.l.b16 %v261
    %v301 = vunpack.c.l.b16 %v262
    %v302 = vunpack.c.l.b16 %v263
    %v303 = vpack.c.b16 %v288, %v287
    %v304 = vpack.c.b16 %v290, %v289
    %v305 = vpack.c.b16 %v292, %v291
    %v306 = vpack.c.b16 %v294, %v293
    %v307 = vpack.c.b16 %v296, %v295
    %v308 = vpack.c.b16 %v298, %v297
    %v309 = vpack.c.b16 %v300, %v299
    %v310 = vpack.c.b16 %v302, %v301
    %319 = vmatprep.subr.bf16.mxu0 0
    %320 = vmatpush1.bf16.msra.mxu0 %v303
    %321 = vmatprep.subr.bf16.mxu0 0
    %322 = vmatpush1.bf16.msra.mxu0 %v304
    %323 = vmatprep.subr.bf16.mxu0 0
    %324 = vmatpush1.bf16.msra.mxu0 %v305
    %325 = vmatprep.subr.bf16.mxu0 0
    %326 = vmatpush1.bf16.msra.mxu0 %v306
    %327 = vmatprep.subr.bf16.mxu0 0
    %328 = vmatpush1.bf16.msra.mxu0 %v307
    %329 = vmatprep.subr.bf16.mxu0 0
    %330 = vmatpush1.bf16.msra.mxu0 %v308
    %331 = vmatprep.subr.bf16.mxu0 0
    %332 = vmatpush1.bf16.msra.mxu0 %v309
    %333 = vmatprep.subr.bf16.mxu0 0
    %334 = vmatpush1.bf16.msra.mxu0 %v310
    %335 = vmatprep.subr.bf16.mxu0 0
    %336 = vmatpush1.bf16.msra.mxu0 0
    %337 = vmatprep.subr.bf16.mxu0 0
    %338 = vmatpush1.bf16.msra.mxu0 0
    %339 = vmatprep.subr.bf16.mxu0 0
    %340 = vmatpush1.bf16.msra.mxu0 0
    %341 = vmatprep.subr.bf16.mxu0 0
    %342 = vmatpush1.bf16.msra.mxu0 0
    %343 = vmatprep.subr.bf16.mxu0 0
    %344 = vmatpush1.bf16.msra.mxu0 0
    %345 = vmatprep.subr.bf16.mxu0 0
    %346 = vmatpush1.bf16.msra.mxu0 0
    %347 = vmatprep.subr.bf16.mxu0 0
    %348 = vmatpush1.bf16.msra.mxu0 0
    %349 = vmatprep.subr.bf16.mxu0 0
    %350 = vmatpush1.bf16.msra.mxu0 0
    %351 = vmatprep.mubr.bf16.mxu0 0
    %352 = vmatmul.mubr.bf16.gmra.mrb[0].mxu0 %v247
    %v353 = vpop.f32.mrb[0].mxu0
    %v354 = vadd.f32 %v269, %v353
    %v355 = vpop.f32.mrb[0].mxu0
    %v356 = vpop.f32.mrb[0].mxu0
    %v357 = vadd.f32 %v269, %v356
    %v358 = vpop.f32.mrb[0].mxu0
    %359 = vdwg.mxu0
    %v360 = vpack.c.bf16 %v357, %v354
    %v362 = vunpack.c.l.b16 %v360
    %v363 = vunpack.c.h.b16 %v360
    %v364 = vpack.c.b16 %v362, %v362
    %v365 = vpack.c.b16 %v363, %v363
    %368 = vst [vmem:[%s7] sm:$0xf] %v364
    %369 = vst [vmem:[%s7 + $0x4] sm:$0xf] %v365
    // Predicated region
    $region38: #{_mlp_forward_jit.1} parent=1 // pred_check
      _
    $region39: #{_mlp_forward_jit.1} parent=1 // pred_check_branch
      %371 = sbr.rel (0) target = $region41
    $region40: #{_mlp_forward_jit.1} parent=1 // pred_region
      _
    $region41: #{_mlp_forward_jit.1} parent=1 // pred_fallthru
      _
    // Predicated region
    $region42: #{_mlp_forward_jit.1} parent=1 // pred_check
      _
    $region43: #{_mlp_forward_jit.1} parent=1 // pred_check_branch
      %373 = sbr.rel (0) target = $region45
    $region44: #{_mlp_forward_jit.1} parent=1 // pred_region
      _
    $region45: #{_mlp_forward_jit.1} parent=1 // pred_fallthru
      _
    %374 = vsyncpa [#allocation3], 1
    %375 = vsyncpa [#allocation5], 1

// kernel: _mlp_forward_jit.1
$region0: #{_mlp_forward_jit.1}
  #allocation0 [shape = 'u32[]', space=smem, size = 0x4, offset = 0x4, fixed_abs, tag = 'smem constant byte address 0x4 - core index']
  #allocation1 [shape = 'u32[144,128]{1,0:T(1,128)}', space=vmem, size = 0x12000, scoped, tag = 'internal scratch']
  %s0 = inlined_call_operand.vmem [shape: bf16[16,32], index: 0, kind: input, shape index: {}]
  %s1 = inlined_call_operand.vmem [shape: bf16[32,128], index: 1, kind: input, shape index: {}]
  %s2 = inlined_call_operand.vmem [shape: f32[1,128], index: 2, kind: input, shape index: {}]
  %s3 = inlined_call_operand.hbm [shape: bf16[128,128], index: 3, kind: input, shape index: {}]
  %s4 = inlined_call_operand.vmem [shape: f32[1,128], index: 4, kind: input, shape index: {}]
  %s5 = inlined_call_operand.hbm [shape: bf16[128,128], index: 5, kind: input, shape index: {}]
  %s6 = inlined_call_operand.vmem [shape: f32[1,128], index: 6, kind: input, shape index: {}]
  %s7 = inlined_call_operand.vmem [shape: bf16[16,128], index: 7, kind: output, shape index: {}]
  %s8 = sld [smem:[#allocation0]]
  $region46: #{_mlp_forward_jit.1} parent=0
    _
  %s10 = ssub.s32 1, %s8
  %s11 = scalar_select 0, %s10, %s8
  $region1: #{_mlp_forward_jit.1} parent=0
    #allocation2 [shape = 'u8[32768]{0}', space=vmem, size = 0x8000, scoped, tag = 'input window, operand 3, single buffered']
    #allocation3 [shape = 's32[1]{0}', space=sflag, size = 0x4, scoped, tag = 'scoped memory for _mlp_forward_jit.1']
    #allocation4 [shape = 'u8[32768]{0}', space=vmem, size = 0x8000, scoped, tag = 'input window, operand 5, single buffered']
    #allocation5 [shape = 's32[1]{0}', space=sflag, size = 0x4, scoped, tag = 'scoped memory for _mlp_forward_jit.1']
    %12 = vsyncpa [#allocation3], 0
    %13 = vsyncpa [#allocation5], 0
    // Predicated region
    $region2: #{_mlp_forward_jit.1} parent=1 // pred_check
      _
    $region3: #{_mlp_forward_jit.1} parent=1 // pred_check_branch
      %15 = sbr.rel (0) target = $region5
    $region4: #{_mlp_forward_jit.1} parent=1 // pred_region
      _
    $region5: #{_mlp_forward_jit.1} parent=1 // pred_fallthru
      _
    // Predicated region
    $region6: #{_mlp_forward_jit.1} parent=1 // pred_check
      _
    $region7: #{_mlp_forward_jit.1} parent=1 // pred_check_branch
      %17 = sbr.rel (0) target = $region9
    $region8: #{_mlp_forward_jit.1} parent=1 // pred_region
      _
    $region9: #{_mlp_forward_jit.1} parent=1 // pred_fallthru
      _
    // Predicated region
    $region10: #{_mlp_forward_jit.1} parent=1 // pred_check
      _
    $region11: #{_mlp_forward_jit.1} parent=1 // pred_check_branch
      %19 = sbr.rel (0) target = $region13
    $region12: #{_mlp_forward_jit.1} parent=1 // pred_region
      _
    $region13: #{_mlp_forward_jit.1} parent=1 // pred_fallthru
      _
    // Predicated region
    $region14: #{_mlp_forward_jit.1} parent=1 // pred_check
      _
    $region15: #{_mlp_forward_jit.1} parent=1 // pred_check_branch
      %21 = sbr.rel (0) target = $region17
    $region16: #{_mlp_forward_jit.1} parent=1 // pred_region
      %s23 = ssub.s32 1024, 1024
      %24 = vsyncadd [#allocation3], %s23
      %s25 = sshll.u32 [#allocation2], 4
      %s26 = int_to_ptr.vmem [resolvable:$true] %s25
      %31 = dma.hbm_to_vmem [thread:$0]  %s3, 1024, %s26, [#allocation3], 64, 64, 4
    $region17: #{_mlp_forward_jit.1} parent=1 // pred_fallthru
      _
    // Predicated region
    $region18: #{_mlp_forward_jit.1} parent=1 // pred_check
      _
    $region19: #{_mlp_forward_jit.1} parent=1 // pred_check_branch
      %33 = sbr.rel (0) target = $region21
    $region20: #{_mlp_forward_jit.1} parent=1 // pred_region
      _
    $region21: #{_mlp_forward_jit.1} parent=1 // pred_fallthru
      _
    // Predicated region
    $region22: #{_mlp_forward_jit.1} parent=1 // pred_check
      _
    $region23: #{_mlp_forward_jit.1} parent=1 // pred_check_branch
      %35 = sbr.rel (0) target = $region25
    $region24: #{_mlp_forward_jit.1} parent=1 // pred_region
      %s37 = ssub.s32 1024, 1024
      %38 = vsyncadd [#allocation5], %s37
      %s39 = sshll.u32 [#allocation4], 4
      %s40 = int_to_ptr.vmem [resolvable:$true] %s39
      %45 = dma.hbm_to_vmem [thread:$0]  %s5, 1024, %s40, [#allocation5], 64, 64, 4
    $region25: #{_mlp_forward_jit.1} parent=1 // pred_fallthru
      _
    // Predicated region
    $region26: #{_mlp_forward_jit.1} parent=1 // pred_check
      _
    $region27: #{_mlp_forward_jit.1} parent=1 // pred_check_branch
      %47 = sbr.rel (0) target = $region29
    $region28: #{_mlp_forward_jit.1} parent=1 // pred_region
      _
    $region29: #{_mlp_forward_jit.1} parent=1 // pred_fallthru
      _
    // Predicated region
    $region30: #{_mlp_forward_jit.1} parent=1 // pred_check
      _
    $region31: #{_mlp_forward_jit.1} parent=1 // pred_check_branch
      %49 = sbr.rel (0) target = $region33
    $region32: #{_mlp_forward_jit.1} parent=1 // pred_region
      %50 = dma.done [#allocation3], 1024
    $region33: #{_mlp_forward_jit.1} parent=1 // pred_fallthru
      _
    // Predicated region
    $region34: #{_mlp_forward_jit.1} parent=1 // pred_check
      _
    $region35: #{_mlp_forward_jit.1} parent=1 // pred_check_branch
      %52 = sbr.rel (0) target = $region37
    $region36: #{_mlp_forward_jit.1} parent=1 // pred_region
      %53 = dma.done [#allocation5], 1024
    $region37: #{_mlp_forward_jit.1} parent=1 // pred_fallthru
      _
    %v55 = vld [vmem:[%s0] sm:$0xf]
    %v56 = vld [vmem:[%s0 + $0x4] sm:$0xf]
    %v57 = vld [vmem:[%s1] sm:$0xf]
    %v58 = vld [vmem:[%s1 + $0x4] sm:$0xf]
    %v59 = vld [vmem:[%s1 + $0x8] sm:$0xf]
    %v60 = vld [vmem:[%s1 + $0xc] sm:$0xf]
    %v61 = vld [vmem:[%s2] sm:$0x1]
    %v63 = vlaneseq
    %v64 = vshrl.u32 %v63, 7
    %v65 = vsub.s32 0, %v64
    %v66 = vrot.slane %v61, %v65
    %v70 = vunpack.c.l.b16 %v55
    %v71 = vunpack.c.l.b16 %v56
    %v72 = vpack.c.b16 %v71, %v70
    %v77 = vunpack.c.l.b16 %v57
    %v78 = vunpack.c.l.b16 %v58
    %v79 = vunpack.c.l.b16 %v59
    %v80 = vunpack.c.l.b16 %v60
    %v81 = vpack.c.b16 %v78, %v77
    %v82 = vpack.c.b16 %v80, %v79
    %vm85 = vcmask 261120
    %v87 = vsel %vm85, %v72, 0
    %89 = vmatprep.subr.bf16.mxu0 0
    %90 = vmatpush1.bf16.msra.mxu0 %v81
    %91 = vmatprep.subr.bf16.mxu0 0
    %92 = vmatpush1.bf16.msra.mxu0 %v82
    %93 = vmatprep.subr.bf16.mxu0 0
    %94 = vmatpush1.bf16.msra.mxu0 0
    %95 = vmatprep.subr.bf16.mxu0 0
    %96 = vmatpush1.bf16.msra.mxu0 0
    %97 = vmatprep.subr.bf16.mxu0 0
    %98 = vmatpush1.bf16.msra.mxu0 0
    %99 = vmatprep.subr.bf16.mxu0 0
    %100 = vmatpush1.bf16.msra.mxu0 0
    %101 = vmatprep.subr.bf16.mxu0 0
    %102 = vmatpush1.bf16.msra.mxu0 0
    %103 = vmatprep.subr.bf16.mxu0 0
    %104 = vmatpush1.bf16.msra.mxu0 0
    %105 = vmatprep.subr.bf16.mxu0 0
    %106 = vmatpush1.bf16.msra.mxu0 0
    %107 = vmatprep.subr.bf16.mxu0 0
    %108 = vmatpush1.bf16.msra.mxu0 0
    %109 = vmatprep.subr.bf16.mxu0 0
    %110 = vmatpush1.bf16.msra.mxu0 0
    %111 = vmatprep.subr.bf16.mxu0 0
    %112 = vmatpush1.bf16.msra.mxu0 0
    %113 = vmatprep.subr.bf16.mxu0 0
    %114 = vmatpush1.bf16.msra.mxu0 0
    %115 = vmatprep.subr.bf16.mxu0 0
    %116 = vmatpush1.bf16.msra.mxu0 0
    %117 = vmatprep.subr.bf16.mxu0 0
    %118 = vmatpush1.bf16.msra.mxu0 0
    %119 = vmatprep.subr.bf16.mxu0 0
    %120 = vmatpush1.bf16.msra.mxu0 0
    %121 = vmatprep.mubr.bf16.mxu0 0
    %122 = vmatmul.mubr.bf16.gmra.mrb[0].mxu0 %v87
    %v123 = vpop.f32.mrb[0].mxu0
    %v124 = vadd.f32 %v66, %v123
    %v125 = vpop.f32.mrb[0].mxu0
    %v126 = vpop.f32.mrb[0].mxu0
    %v127 = vadd.f32 %v66, %v126
    %v128 = vpop.f32.mrb[0].mxu0
    %129 = vdwg.mxu0
    %v130 = vmax.f32 %v124, 0.0
    %v131 = vmax.f32 %v127, 0.0
    %v132 = vpack.c.bf16 %v131, %v130
    %v133 = vld [vmem:[#allocation2] sm:$0xf]
    %v134 = vld [vmem:[#allocation2 + $0x4] sm:$0xf]
    %v135 = vld [vmem:[#allocation2 + $0x8] sm:$0xf]
    %v136 = vld [vmem:[#allocation2 + $0xc] sm:$0xf]
    %v137 = vld [vmem:[#allocation2 + $0x10] sm:$0xf]
    %v138 = vld [vmem:[#allocation2 + $0x14] sm:$0xf]
    %v139 = vld [vmem:[#allocation2 + $0x18] sm:$0xf]
    %v140 = vld [vmem:[#allocation2 + $0x1c] sm:$0xf]
    %v141 = vld [vmem:[#allocation2 + $0x20] sm:$0xf]
    %v142 = vld [vmem:[#allocation2 + $0x24] sm:$0xf]
    %v143 = vld [vmem:[#allocation2 + $0x28] sm:$0xf]
    %v144 = vld [vmem:[#allocation2 + $0x2c] sm:$0xf]
    %v145 = vld [vmem:[#allocation2 + $0x30] sm:$0xf]
    %v146 = vld [vmem:[#allocation2 + $0x34] sm:$0xf]
    %v147 = vld [vmem:[#allocation2 + $0x38] sm:$0xf]
    %v148 = vld [vmem:[#allocation2 + $0x3c] sm:$0xf]
    %v149 = vld [vmem:[%s4] sm:$0x1]
    %v151 = vlaneseq
    %v152 = vshrl.u32 %v151, 7
    %v153 = vsub.s32 0, %v152
    %v154 = vrot.slane %v149, %v153
    %v172 = vunpack.c.l.b16 %v133
    %v173 = vunpack.c.l.b16 %v134
    %v174 = vunpack.c.l.b16 %v135
    %v175 = vunpack.c.l.b16 %v136
    %v176 = vunpack.c.l.b16 %v137
    %v177 = vunpack.c.l.b16 %v138
    %v178 = vunpack.c.l.b16 %v139
    %v179 = vunpack.c.l.b16 %v140
    %v180 = vunpack.c.l.b16 %v141
    %v181 = vunpack.c.l.b16 %v142
    %v182 = vunpack.c.l.b16 %v143
    %v183 = vunpack.c.l.b16 %v144
    %v184 = vunpack.c.l.b16 %v145
    %v185 = vunpack.c.l.b16 %v146
    %v186 = vunpack.c.l.b16 %v147
    %v187 = vunpack.c.l.b16 %v148
    %v188 = vpack.c.b16 %v173, %v172
    %v189 = vpack.c.b16 %v175, %v174
    %v190 = vpack.c.b16 %v177, %v176
    %v191 = vpack.c.b16 %v179, %v178
    %v192 = vpack.c.b16 %v181, %v180
    %v193 = vpack.c.b16 %v183, %v182
    %v194 = vpack.c.b16 %v185, %v184
    %v195 = vpack.c.b16 %v187, %v186
    %204 = vmatprep.subr.bf16.mxu0 0
    %205 = vmatpush1.bf16.msra.mxu0 %v188
    %206 = vmatprep.subr.bf16.mxu0 0
    %207 = vmatpush1.bf16.msra.mxu0 %v189
    %208 = vmatprep.subr.bf16.mxu0 0
    %209 = vmatpush1.bf16.msra.mxu0 %v190
    %210 = vmatprep.subr.bf16.mxu0 0
    %211 = vmatpush1.bf16.msra.mxu0 %v191
    %212 = vmatprep.subr.bf16.mxu0 0
    %213 = vmatpush1.bf16.msra.mxu0 %v192
    %214 = vmatprep.subr.bf16.mxu0 0
    %215 = vmatpush1.bf16.msra.mxu0 %v193
    %216 = vmatprep.subr.bf16.mxu0 0
    %217 = vmatpush1.bf16.msra.mxu0 %v194
    %218 = vmatprep.subr.bf16.mxu0 0
    %219 = vmatpush1.bf16.msra.mxu0 %v195
    %220 = vmatprep.subr.bf16.mxu0 0
    %221 = vmatpush1.bf16.msra.mxu0 0
    %222 = vmatprep.subr.bf16.mxu0 0
    %223 = vmatpush1.bf16.msra.mxu0 0
    %224 = vmatprep.subr.bf16.mxu0 0
    %225 = vmatpush1.bf16.msra.mxu0 0
    %226 = vmatprep.subr.bf16.mxu0 0
    %227 = vmatpush1.bf16.msra.mxu0 0
    %228 = vmatprep.subr.bf16.mxu0 0
    %229 = vmatpush1.bf16.msra.mxu0 0
    %230 = vmatprep.subr.bf16.mxu0 0
    %231 = vmatpush1.bf16.msra.mxu0 0
    %232 = vmatprep.subr.bf16.mxu0 0
    %233 = vmatpush1.bf16.msra.mxu0 0
    %234 = vmatprep.subr.bf16.mxu0 0
    %235 = vmatpush1.bf16.msra.mxu0 0
    %236 = vmatprep.mubr.bf16.mxu0 0
    %237 = vmatmul.mubr.bf16.gmra.mrb[0].mxu0 %v132
    %v238 = vpop.f32.mrb[0].mxu0
    %v239 = vadd.f32 %v154, %v238
    %v240 = vpop.f32.mrb[0].mxu0
    %v241 = vpop.f32.mrb[0].mxu0
    %v242 = vadd.f32 %v154, %v241
    %v243 = vpop.f32.mrb[0].mxu0
    %244 = vdwg.mxu0
    %v245 = vmax.f32 %v239, 0.0
    %v246 = vmax.f32 %v242, 0.0
    %v247 = vpack.c.bf16 %v246, %v245
    %v248 = vld [vmem:[#allocation4] sm:$0xf]
    %v249 = vld [vmem:[#allocation4 + $0x4] sm:$0xf]
    %v250 = vld [vmem:[#allocation4 + $0x8] sm:$0xf]
    %v251 = vld [vmem:[#allocation4 + $0xc] sm:$0xf]
    %v252 = vld [vmem:[#allocation4 + $0x10] sm:$0xf]
    %v253 = vld [vmem:[#allocation4 + $0x14] sm:$0xf]
    %v254 = vld [vmem:[#allocation4 + $0x18] sm:$0xf]
    %v255 = vld [vmem:[#allocation4 + $0x1c] sm:$0xf]
    %v256 = vld [vmem:[#allocation4 + $0x20] sm:$0xf]
    %v257 = vld [vmem:[#allocation4 + $0x24] sm:$0xf]
    %v258 = vld [vmem:[#allocation4 + $0x28] sm:$0xf]
    %v259 = vld [vmem:[#allocation4 + $0x2c] sm:$0xf]
    %v260 = vld [vmem:[#allocation4 + $0x30] sm:$0xf]
    %v261 = vld [vmem:[#allocation4 + $0x34] sm:$0xf]
    %v262 = vld [vmem:[#allocation4 + $0x38] sm:$0xf]
    %v263 = vld [vmem:[#allocation4 + $0x3c] sm:$0xf]
    %v264 = vld [vmem:[%s6] sm:$0x1]
    %v266 = vlaneseq
    %v267 = vshrl.u32 %v266, 7
    %v268 = vsub.s32 0, %v267
    %v269 = vrot.slane %v264, %v268
    %v287 = vunpack.c.l.b16 %v248
    %v288 = vunpack.c.l.b16 %v249
    %v289 = vunpack.c.l.b16 %v250
    %v290 = vunpack.c.l.b16 %v251
    %v291 = vunpack.c.l.b16 %v252
    %v292 = vunpack.c.l.b16 %v253
    %v293 = vunpack.c.l.b16 %v254
    %v294 = vunpack.c.l.b16 %v255
    %v295 = vunpack.c.l.b16 %v256
    %v296 = vunpack.c.l.b16 %v257
    %v297 = vunpack.c.l.b16 %v258
    %v298 = vunpack.c.l.b16 %v259
    %v299 = vunpack.c.l.b16 %v260
    %v300 = vunpack.c.l.b16 %v261
    %v301 = vunpack.c.l.b16 %v262
    %v302 = vunpack.c.l.b16 %v263
    %v303 = vpack.c.b16 %v288, %v287
    %v304 = vpack.c.b16 %v290, %v289
    %v305 = vpack.c.b16 %v292, %v291
    %v306 = vpack.c.b16 %v294, %v293
    %v307 = vpack.c.b16 %v296, %v295
    %v308 = vpack.c.b16 %v298, %v297
    %v309 = vpack.c.b16 %v300, %v299
    %v310 = vpack.c.b16 %v302, %v301
    %319 = vmatprep.subr.bf16.mxu0 0
    %320 = vmatpush1.bf16.msra.mxu0 %v303
    %321 = vmatprep.subr.bf16.mxu0 0
    %322 = vmatpush1.bf16.msra.mxu0 %v304
    %323 = vmatprep.subr.bf16.mxu0 0
    %324 = vmatpush1.bf16.msra.mxu0 %v305
    %325 = vmatprep.subr.bf16.mxu0 0
    %326 = vmatpush1.bf16.msra.mxu0 %v306
    %327 = vmatprep.subr.bf16.mxu0 0
    %328 = vmatpush1.bf16.msra.mxu0 %v307
    %329 = vmatprep.subr.bf16.mxu0 0
    %330 = vmatpush1.bf16.msra.mxu0 %v308
    %331 = vmatprep.subr.bf16.mxu0 0
    %332 = vmatpush1.bf16.msra.mxu0 %v309
    %333 = vmatprep.subr.bf16.mxu0 0
    %334 = vmatpush1.bf16.msra.mxu0 %v310
    %335 = vmatprep.subr.bf16.mxu0 0
    %336 = vmatpush1.bf16.msra.mxu0 0
    %337 = vmatprep.subr.bf16.mxu0 0
    %338 = vmatpush1.bf16.msra.mxu0 0
    %339 = vmatprep.subr.bf16.mxu0 0
    %340 = vmatpush1.bf16.msra.mxu0 0
    %341 = vmatprep.subr.bf16.mxu0 0
    %342 = vmatpush1.bf16.msra.mxu0 0
    %343 = vmatprep.subr.bf16.mxu0 0
    %344 = vmatpush1.bf16.msra.mxu0 0
    %345 = vmatprep.subr.bf16.mxu0 0
    %346 = vmatpush1.bf16.msra.mxu0 0
    %347 = vmatprep.subr.bf16.mxu0 0
    %348 = vmatpush1.bf16.msra.mxu0 0
    %349 = vmatprep.subr.bf16.mxu0 0
    %350 = vmatpush1.bf16.msra.mxu0 0
    %351 = vmatprep.mubr.bf16.mxu0 0
    %352 = vmatmul.mubr.bf16.gmra.mrb[0].mxu0 %v247
    %v353 = vpop.f32.mrb[0].mxu0
    %v354 = vadd.f32 %v269, %v353
    %v355 = vpop.f32.mrb[0].mxu0
    %v356 = vpop.f32.mrb[0].mxu0
    %v357 = vadd.f32 %v269, %v356
    %v358 = vpop.f32.mrb[0].mxu0
    %359 = vdwg.mxu0
    %v360 = vpack.c.bf16 %v357, %v354
    %v362 = vunpack.c.l.b16 %v360
    %v363 = vunpack.c.h.b16 %v360
    %v364 = vpack.c.b16 %v362, %v362
    %v365 = vpack.c.b16 %v363, %v363
    %368 = vst [vmem:[%s7] sm:$0xf] %v364
    %369 = vst [vmem:[%s7 + $0x4] sm:$0xf] %v365
    // Predicated region
    $region38: #{_mlp_forward_jit.1} parent=1 // pred_check
      _
    $region39: #{_mlp_forward_jit.1} parent=1 // pred_check_branch
      %371 = sbr.rel (0) target = $region41
    $region40: #{_mlp_forward_jit.1} parent=1 // pred_region
      _
    $region41: #{_mlp_forward_jit.1} parent=1 // pred_fallthru
      _
    // Predicated region
    $region42: #{_mlp_forward_jit.1} parent=1 // pred_check
      _
    $region43: #{_mlp_forward_jit.1} parent=1 // pred_check_branch
      %373 = sbr.rel (0) target = $region45
    $region44: #{_mlp_forward_jit.1} parent=1 // pred_region
      _
    $region45: #{_mlp_forward_jit.1} parent=1 // pred_fallthru
      _
    %374 = vsyncpa [#allocation3], 1
    %375 = vsyncpa [#allocation5], 1

</llo_original>
